<compile_context>
chip_gen: v5e
topology: v5e:2x2
jax: 0.10.0
libtpu: 0.0.40
codegen_flags: <defaults>
</compile_context>

<pallas_src>
import functools

import jax
import jax.numpy as jnp
from jax.experimental import pallas as pl
from jax.experimental.pallas import tpu as pltpu


def _rnn_chunk_kernel(x_ref, wih_ref, whh_ref, b_ref, o_ref, h_ref, *, tt):
    """Processes TT consecutive timesteps of one batch row per grid step.

    x_ref  : (1, TT, I) f32   input chunk (batch row b, steps [c*TT,(c+1)*TT))
    wih_ref: (I, H)     bf16  W_ih^T (resident: constant index_map)
    whh_ref: (H, H)     bf16  W_hh^T (resident)
    b_ref  : (1, H)     f32   b_ih + b_hh (resident)
    o_ref  : (1, TT, H) bf16  output chunk
    h_ref  : (1, H)     f32   VMEM scratch carrying h_{t-1} across chunks
    """
    c = pl.program_id(1)

    @pl.when(c == 0)
    def _():
        # New batch row: reset the recurrence carry.
        h_ref[...] = jnp.zeros_like(h_ref)

    # Hoisted input projection for the whole chunk: one MXU GEMM with M = TT
    # rows instead of TT GEMMs with M = 1, plus the folded bias (one VPU add).
    x_bf = x_ref[0].astype(jnp.bfloat16)                       # (TT, I)
    u = jnp.dot(x_bf, wih_ref[...],
                preferred_element_type=jnp.float32)            # (TT, H) f32
    u = u + b_ref[...]                                         # broadcast (1,H)

    whh = whh_ref[...]                                         # (H, H) bf16
    h = h_ref[...]                                             # (1, H) f32

    # Sequential recurrence over the chunk.  TT is a static Python constant, so
    # this trace-time loop is fully unrolled with static slices (values are
    # tiny (1, H) vregs, so live-range growth is a non-issue).  Stores below go
    # into the VMEM output block; the HBM writeback is still one DMA per chunk.
    for t in range(tt):
        acc = u[t:t + 1, :] + jnp.dot(h.astype(jnp.bfloat16), whh,
                                      preferred_element_type=jnp.float32)
        h = jnp.tanh(acc)                                      # (1, H) f32, EUP
        o_ref[0, t:t + 1, :] = h.astype(o_ref.dtype)

    h_ref[...] = h


def rnn_forward_pallas(x, w_ih, w_hh, b_ih, b_hh, *, tt=16):
    """Single-layer tanh RNN forward.

    x     : (B, T, I) float32 (batch_first)
    w_ih  : (H, I), w_hh: (H, H), b_ih/b_hh: (H,)
    returns: (B, T, H) bfloat16 — hidden state at every timestep.
    """
    B, T, I = x.shape
    H = w_ih.shape[0]

    # Pad the time axis to a multiple of TT (padded steps come after the valid
    # ones, so they cannot affect valid outputs; they are sliced off below).
    n_chunks = pl.cdiv(T, tt)
    t_pad = n_chunks * tt
    x_p = x.astype(jnp.float32)
    if t_pad != T:
        x_p = jnp.pad(x_p, ((0, 0), (0, t_pad - T), (0, 0)))

    # One-time tiny weight preps (stay resident in VMEM across the whole grid).
    wih_t = jnp.transpose(w_ih, (1, 0)).astype(jnp.bfloat16)    # (I, H)
    whh_t = jnp.transpose(w_hh, (1, 0)).astype(jnp.bfloat16)    # (H, H)
    bias = (b_ih + b_hh).astype(jnp.float32).reshape(1, H)      # (1, H)

    cost = pl.CostEstimate(
        flops=2 * B * t_pad * (I + H) * H,
        transcendentals=B * t_pad * H,
        bytes_accessed=(x_p.size * 4 + wih_t.size * 2 + whh_t.size * 2
                        + bias.size * 4 + B * t_pad * H * 2),
    )

    out = pl.pallas_call(
        functools.partial(_rnn_chunk_kernel, tt=tt),
        out_shape=jax.ShapeDtypeStruct((B, t_pad, H), jnp.bfloat16),
        grid_spec=pltpu.PrefetchScalarGridSpec(
            num_scalar_prefetch=0,
            grid=(B, n_chunks),
            in_specs=[
                pl.BlockSpec((1, tt, I), lambda b, c: (b, c, 0)),   # x chunk
                pl.BlockSpec((I, H), lambda b, c: (0, 0)),          # W_ih^T
                pl.BlockSpec((H, H), lambda b, c: (0, 0)),          # W_hh^T
                pl.BlockSpec((1, H), lambda b, c: (0, 0)),          # bias
            ],
            out_specs=pl.BlockSpec((1, tt, H), lambda b, c: (b, c, 0)),
            scratch_shapes=[pltpu.VMEM((1, H), jnp.float32)],       # carried h
        ),
        compiler_params=pltpu.CompilerParams(
            # Batch rows are independent (v7x megacore can split them); the
            # time-chunk axis carries h in scratch -> must stay sequential.
            dimension_semantics=("parallel", "arbitrary"),
        ),
        cost_estimate=cost,
    )(x_p, wih_t, whh_t, bias)

    if t_pad != T:
        out = out[:, :T, :]
    return out


def rnn_forward_ref(x, w_ih, w_hh, b_ih, b_hh):
    """Pure-JAX reference with the same mixed precision as the kernel."""
    B, T, I = x.shape
    H = w_ih.shape[0]
    wih_t = jnp.transpose(w_ih, (1, 0)).astype(jnp.bfloat16)
    whh_t = jnp.transpose(w_hh, (1, 0)).astype(jnp.bfloat16)
    bias = (b_ih + b_hh).astype(jnp.float32)[None, :]
    h = jnp.zeros((B, H), jnp.float32)
    outs = []
    for t in range(T):
        acc = jnp.dot(x[:, t, :].astype(jnp.bfloat16), wih_t,
                      preferred_element_type=jnp.float32)
        acc = acc + jnp.dot(h.astype(jnp.bfloat16), whh_t,
                            preferred_element_type=jnp.float32)
        h = jnp.tanh(acc + bias)
        outs.append(h)
    return jnp.stack(outs, axis=1)          # (B, T, H) f32


class RNNPallas:
    """Mirrors the (empty) `RNN` module with canonical nn.RNN-style parameters."""

    def __init__(self, input_size, hidden_size, key):
        k1, k2, k3, k4 = jax.random.split(key, 4)
        bound = 1.0 / jnp.sqrt(hidden_size)
        self.w_ih = jax.random.uniform(
            k1, (hidden_size, input_size), minval=-bound, maxval=bound,
            dtype=jnp.float32)
        self.w_hh = jax.random.uniform(
            k2, (hidden_size, hidden_size), minval=-bound, maxval=bound,
            dtype=jnp.float32)
        self.b_ih = jax.random.uniform(
            k3, (hidden_size,), minval=-bound, maxval=bound, dtype=jnp.float32)
        self.b_hh = jax.random.uniform(
            k4, (hidden_size,), minval=-bound, maxval=bound, dtype=jnp.float32)

    def __call__(self, x):
        return rnn_forward_pallas(x, self.w_ih, self.w_hh, self.b_ih, self.b_hh)


if __name__ == "__main__":
    key = jax.random.PRNGKey(0)
    k_x, k_p = jax.random.split(key)

    # Small shapes: batch=2, seq=40 (exercises the T % TT != 0 padding path
    # with TT=16), input=16, hidden=32.
    B, T, I, H = 2, 40, 16, 32

    x = jax.random.normal(k_x, (B, T, I), dtype=jnp.float32)
    model = RNNPallas(I, H, k_p)

    y = jax.block_until_ready(model(x))
    ref = jax.block_until_ready(
        rnn_forward_ref(x, model.w_ih, model.w_hh, model.b_ih, model.b_hh))

    assert y.shape == (B, T, H), y.shape
    y_f32 = y.astype(jnp.float32)
    assert bool(jnp.all(jnp.isfinite(y_f32)))
    # Output is bf16; carry stays f32 in both kernel and reference.
    assert jnp.allclose(y_f32, ref, atol=2e-2, rtol=2e-2)

    print("KERNEL_OK")
</pallas_src>

<mosaic_0001>
module attributes {stable_mosaic.version = 11 : i64} {
  func.func @_rnn_chunk_kernel(%arg0: i32, %arg1: i32, %arg2: memref<1x16x16xf32, #tpu.memory_space<vmem>>, %arg3: memref<16x32xbf16, #tpu.memory_space<vmem>>, %arg4: memref<32x32xbf16, #tpu.memory_space<vmem>>, %arg5: memref<1x32xf32, #tpu.memory_space<vmem>>, %arg6: memref<1x16x32xbf16, #tpu.memory_space<vmem>>, %arg7: memref<1x32xf32, #tpu.memory_space<vmem>>) attributes {dimension_semantics = [#tpu.dimension_semantics<parallel>, #tpu.dimension_semantics<arbitrary>], iteration_bounds = array<i64: 2, 3>, scalar_prefetch = 0 : i64, scratch_operands = 1 : i64, tpu.core_type = #tpu.core_type<tc>, window_params = [{transform_indices = @transform_0, window_bounds = array<i64: 1, 16, 16>}, {pipeline_mode = #tpu.pipeline_mode<synchronous>, transform_indices = @transform_1, window_bounds = array<i64: 16, 32>}, {pipeline_mode = #tpu.pipeline_mode<synchronous>, transform_indices = @transform_2, window_bounds = array<i64: 32, 32>}, {pipeline_mode = #tpu.pipeline_mode<synchronous>, transform_indices = @transform_3, window_bounds = array<i64: 1, 32>}, {transform_indices = @transform_4, window_bounds = array<i64: 1, 16, 32>}]} {
    %c0_i32 = arith.constant 0 : i32
    %0 = arith.cmpi eq, %arg1, %c0_i32 : i32
    %1 = arith.extui %0 : i1 to i32
    %c0_i32_0 = arith.constant 0 : i32
    %2 = arith.cmpi ne, %1, %c0_i32_0 : i32
    scf.if %2 {
      %cst_62 = arith.constant 0.000000e+00 : f32
      %158 = vector.broadcast %cst_62 : f32 to vector<1x32xf32>
      %c0_63 = arith.constant 0 : index
      %c0_64 = arith.constant 0 : index
      %159 = vector.load %arg7[%c0_63, %c0_64] : memref<1x32xf32, #tpu.memory_space<vmem>>, vector<1x32xf32>
      tpu.vector_store %arg7[%c0_63, %c0_64], %158 {strides = array<i32>} : memref<1x32xf32, #tpu.memory_space<vmem>>, vector<1x32xf32>,
    } else {
    }
    %c0 = arith.constant 0 : index
    %c0_1 = arith.constant 0 : index
    %c0_2 = arith.constant 0 : index
    %3 = vector.load %arg2[%c0, %c0_1, %c0_2] : memref<1x16x16xf32, #tpu.memory_space<vmem>>, vector<1x16x16xf32>
    %4 = vector.shape_cast %3 : vector<1x16x16xf32> to vector<16x16xf32>
    %5 = arith.truncf %4 : vector<16x16xf32> to vector<16x16xbf16>
    %c0_3 = arith.constant 0 : index
    %c0_4 = arith.constant 0 : index
    %6 = vector.load %arg3[%c0_3, %c0_4] : memref<16x32xbf16, #tpu.memory_space<vmem>>, vector<16x32xbf16>
    %cst = arith.constant dense<0.000000e+00> : vector<16x32xf32>
    %7 = tpu.matmul %5, %6, %cst {dimension_numbers = #tpu.dot_dimension_numbers<[1], [0], [0], [1], [0, 0, 1, 1], [], []>} : vector<16x16xbf16>, vector<16x32xbf16>, vector<16x32xf32> -> vector<16x32xf32>
    %c0_5 = arith.constant 0 : index
    %c0_6 = arith.constant 0 : index
    %8 = vector.load %arg5[%c0_5, %c0_6] : memref<1x32xf32, #tpu.memory_space<vmem>>, vector<1x32xf32>
    %9 = vector.broadcast %8 : vector<1x32xf32> to vector<16x32xf32>
    %10 = arith.addf %7, %9 : vector<16x32xf32>
    %c0_7 = arith.constant 0 : index
    %c0_8 = arith.constant 0 : index
    %11 = vector.load %arg4[%c0_7, %c0_8] : memref<32x32xbf16, #tpu.memory_space<vmem>>, vector<32x32xbf16>
    %c0_9 = arith.constant 0 : index
    %c0_10 = arith.constant 0 : index
    %12 = vector.load %arg7[%c0_9, %c0_10] : memref<1x32xf32, #tpu.memory_space<vmem>>, vector<1x32xf32>
    %13 = vector.extract_strided_slice %10 {offsets = [0, 0], sizes = [1, 32], strides = [1, 1]} : vector<16x32xf32> to vector<1x32xf32>
    %14 = arith.truncf %12 : vector<1x32xf32> to vector<1x32xbf16>
    %cst_11 = arith.constant dense<0.000000e+00> : vector<1x32xf32>
    %15 = tpu.matmul %14, %11, %cst_11 {dimension_numbers = #tpu.dot_dimension_numbers<[1], [0], [0], [1], [0, 0, 1, 1], [], []>} : vector<1x32xbf16>, vector<32x32xbf16>, vector<1x32xf32> -> vector<1x32xf32>
    %16 = arith.addf %13, %15 : vector<1x32xf32>
    %17 = math.tanh %16 : vector<1x32xf32>
    %18 = arith.truncf %17 : vector<1x32xf32> to vector<1x32xbf16>
    %c0_12 = arith.constant 0 : index
    %c0_13 = arith.constant 0 : index
    %c0_14 = arith.constant 0 : index
    %19 = vector.load %arg6[%c0_12, %c0_13, %c0_14] : memref<1x16x32xbf16, #tpu.memory_space<vmem>>, vector<1x1x32xbf16>
    %20 = vector.shape_cast %19 : vector<1x1x32xbf16> to vector<1x32xbf16>
    %21 = vector.shape_cast %18 : vector<1x32xbf16> to vector<1x1x32xbf16>
    tpu.vector_store %arg6[%c0_12, %c0_13, %c0_14], %21 {strides = array<i32>} : memref<1x16x32xbf16, #tpu.memory_space<vmem>>, vector<1x1x32xbf16>,
    %22 = vector.extract_strided_slice %10 {offsets = [1, 0], sizes = [1, 32], strides = [1, 1]} : vector<16x32xf32> to vector<1x32xf32>
    %23 = arith.truncf %17 : vector<1x32xf32> to vector<1x32xbf16>
    %cst_15 = arith.constant dense<0.000000e+00> : vector<1x32xf32>
    %24 = tpu.matmul %23, %11, %cst_15 {dimension_numbers = #tpu.dot_dimension_numbers<[1], [0], [0], [1], [0, 0, 1, 1], [], []>} : vector<1x32xbf16>, vector<32x32xbf16>, vector<1x32xf32> -> vector<1x32xf32>
    %25 = arith.addf %22, %24 : vector<1x32xf32>
    %26 = math.tanh %25 : vector<1x32xf32>
    %27 = arith.truncf %26 : vector<1x32xf32> to vector<1x32xbf16>
    %c0_16 = arith.constant 0 : index
    %c1 = arith.constant 1 : index
    %c0_17 = arith.constant 0 : index
    %28 = vector.load %arg6[%c0_16, %c1, %c0_17] : memref<1x16x32xbf16, #tpu.memory_space<vmem>>, vector<1x1x32xbf16>
    %29 = vector.shape_cast %28 : vector<1x1x32xbf16> to vector<1x32xbf16>
    %30 = vector.shape_cast %27 : vector<1x32xbf16> to vector<1x1x32xbf16>
    tpu.vector_store %arg6[%c0_16, %c1, %c0_17], %30 {strides = array<i32>} : memref<1x16x32xbf16, #tpu.memory_space<vmem>>, vector<1x1x32xbf16>,
    %31 = vector.extract_strided_slice %10 {offsets = [2, 0], sizes = [1, 32], strides = [1, 1]} : vector<16x32xf32> to vector<1x32xf32>
    %32 = arith.truncf %26 : vector<1x32xf32> to vector<1x32xbf16>
    %cst_18 = arith.constant dense<0.000000e+00> : vector<1x32xf32>
    %33 = tpu.matmul %32, %11, %cst_18 {dimension_numbers = #tpu.dot_dimension_numbers<[1], [0], [0], [1], [0, 0, 1, 1], [], []>} : vector<1x32xbf16>, vector<32x32xbf16>, vector<1x32xf32> -> vector<1x32xf32>
    %34 = arith.addf %31, %33 : vector<1x32xf32>
    %35 = math.tanh %34 : vector<1x32xf32>
    %36 = arith.truncf %35 : vector<1x32xf32> to vector<1x32xbf16>
    %c0_19 = arith.constant 0 : index
    %c2 = arith.constant 2 : index
    %c0_20 = arith.constant 0 : index
    %37 = vector.load %arg6[%c0_19, %c2, %c0_20] : memref<1x16x32xbf16, #tpu.memory_space<vmem>>, vector<1x1x32xbf16>
    %38 = vector.shape_cast %37 : vector<1x1x32xbf16> to vector<1x32xbf16>
    %39 = vector.shape_cast %36 : vector<1x32xbf16> to vector<1x1x32xbf16>
    tpu.vector_store %arg6[%c0_19, %c2, %c0_20], %39 {strides = array<i32>} : memref<1x16x32xbf16, #tpu.memory_space<vmem>>, vector<1x1x32xbf16>,
    %40 = vector.extract_strided_slice %10 {offsets = [3, 0], sizes = [1, 32], strides = [1, 1]} : vector<16x32xf32> to vector<1x32xf32>
    %41 = arith.truncf %35 : vector<1x32xf32> to vector<1x32xbf16>
    %cst_21 = arith.constant dense<0.000000e+00> : vector<1x32xf32>
    %42 = tpu.matmul %41, %11, %cst_21 {dimension_numbers = #tpu.dot_dimension_numbers<[1], [0], [0], [1], [0, 0, 1, 1], [], []>} : vector<1x32xbf16>, vector<32x32xbf16>, vector<1x32xf32> -> vector<1x32xf32>
    %43 = arith.addf %40, %42 : vector<1x32xf32>
    %44 = math.tanh %43 : vector<1x32xf32>
    %45 = arith.truncf %44 : vector<1x32xf32> to vector<1x32xbf16>
    %c0_22 = arith.constant 0 : index
    %c3 = arith.constant 3 : index
    %c0_23 = arith.constant 0 : index
    %46 = vector.load %arg6[%c0_22, %c3, %c0_23] : memref<1x16x32xbf16, #tpu.memory_space<vmem>>, vector<1x1x32xbf16>
    %47 = vector.shape_cast %46 : vector<1x1x32xbf16> to vector<1x32xbf16>
    %48 = vector.shape_cast %45 : vector<1x32xbf16> to vector<1x1x32xbf16>
    tpu.vector_store %arg6[%c0_22, %c3, %c0_23], %48 {strides = array<i32>} : memref<1x16x32xbf16, #tpu.memory_space<vmem>>, vector<1x1x32xbf16>,
    %49 = vector.extract_strided_slice %10 {offsets = [4, 0], sizes = [1, 32], strides = [1, 1]} : vector<16x32xf32> to vector<1x32xf32>
    %50 = arith.truncf %44 : vector<1x32xf32> to vector<1x32xbf16>
    %cst_24 = arith.constant dense<0.000000e+00> : vector<1x32xf32>
    %51 = tpu.matmul %50, %11, %cst_24 {dimension_numbers = #tpu.dot_dimension_numbers<[1], [0], [0], [1], [0, 0, 1, 1], [], []>} : vector<1x32xbf16>, vector<32x32xbf16>, vector<1x32xf32> -> vector<1x32xf32>
    %52 = arith.addf %49, %51 : vector<1x32xf32>
    %53 = math.tanh %52 : vector<1x32xf32>
    %54 = arith.truncf %53 : vector<1x32xf32> to vector<1x32xbf16>
    %c0_25 = arith.constant 0 : index
    %c4 = arith.constant 4 : index
    %c0_26 = arith.constant 0 : index
    %55 = vector.load %arg6[%c0_25, %c4, %c0_26] : memref<1x16x32xbf16, #tpu.memory_space<vmem>>, vector<1x1x32xbf16>
    %56 = vector.shape_cast %55 : vector<1x1x32xbf16> to vector<1x32xbf16>
    %57 = vector.shape_cast %54 : vector<1x32xbf16> to vector<1x1x32xbf16>
    tpu.vector_store %arg6[%c0_25, %c4, %c0_26], %57 {strides = array<i32>} : memref<1x16x32xbf16, #tpu.memory_space<vmem>>, vector<1x1x32xbf16>,
    %58 = vector.extract_strided_slice %10 {offsets = [5, 0], sizes = [1, 32], strides = [1, 1]} : vector<16x32xf32> to vector<1x32xf32>
    %59 = arith.truncf %53 : vector<1x32xf32> to vector<1x32xbf16>
    %cst_27 = arith.constant dense<0.000000e+00> : vector<1x32xf32>
    %60 = tpu.matmul %59, %11, %cst_27 {dimension_numbers = #tpu.dot_dimension_numbers<[1], [0], [0], [1], [0, 0, 1, 1], [], []>} : vector<1x32xbf16>, vector<32x32xbf16>, vector<1x32xf32> -> vector<1x32xf32>
    %61 = arith.addf %58, %60 : vector<1x32xf32>
    %62 = math.tanh %61 : vector<1x32xf32>
    %63 = arith.truncf %62 : vector<1x32xf32> to vector<1x32xbf16>
    %c0_28 = arith.constant 0 : index
    %c5 = arith.constant 5 : index
    %c0_29 = arith.constant 0 : index
    %64 = vector.load %arg6[%c0_28, %c5, %c0_29] : memref<1x16x32xbf16, #tpu.memory_space<vmem>>, vector<1x1x32xbf16>
    %65 = vector.shape_cast %64 : vector<1x1x32xbf16> to vector<1x32xbf16>
    %66 = vector.shape_cast %63 : vector<1x32xbf16> to vector<1x1x32xbf16>
    tpu.vector_store %arg6[%c0_28, %c5, %c0_29], %66 {strides = array<i32>} : memref<1x16x32xbf16, #tpu.memory_space<vmem>>, vector<1x1x32xbf16>,
    %67 = vector.extract_strided_slice %10 {offsets = [6, 0], sizes = [1, 32], strides = [1, 1]} : vector<16x32xf32> to vector<1x32xf32>
    %68 = arith.truncf %62 : vector<1x32xf32> to vector<1x32xbf16>
    %cst_30 = arith.constant dense<0.000000e+00> : vector<1x32xf32>
    %69 = tpu.matmul %68, %11, %cst_30 {dimension_numbers = #tpu.dot_dimension_numbers<[1], [0], [0], [1], [0, 0, 1, 1], [], []>} : vector<1x32xbf16>, vector<32x32xbf16>, vector<1x32xf32> -> vector<1x32xf32>
    %70 = arith.addf %67, %69 : vector<1x32xf32>
    %71 = math.tanh %70 : vector<1x32xf32>
    %72 = arith.truncf %71 : vector<1x32xf32> to vector<1x32xbf16>
    %c0_31 = arith.constant 0 : index
    %c6 = arith.constant 6 : index
    %c0_32 = arith.constant 0 : index
    %73 = vector.load %arg6[%c0_31, %c6, %c0_32] : memref<1x16x32xbf16, #tpu.memory_space<vmem>>, vector<1x1x32xbf16>
    %74 = vector.shape_cast %73 : vector<1x1x32xbf16> to vector<1x32xbf16>
    %75 = vector.shape_cast %72 : vector<1x32xbf16> to vector<1x1x32xbf16>
    tpu.vector_store %arg6[%c0_31, %c6, %c0_32], %75 {strides = array<i32>} : memref<1x16x32xbf16, #tpu.memory_space<vmem>>, vector<1x1x32xbf16>,
    %76 = vector.extract_strided_slice %10 {offsets = [7, 0], sizes = [1, 32], strides = [1, 1]} : vector<16x32xf32> to vector<1x32xf32>
    %77 = arith.truncf %71 : vector<1x32xf32> to vector<1x32xbf16>
    %cst_33 = arith.constant dense<0.000000e+00> : vector<1x32xf32>
    %78 = tpu.matmul %77, %11, %cst_33 {dimension_numbers = #tpu.dot_dimension_numbers<[1], [0], [0], [1], [0, 0, 1, 1], [], []>} : vector<1x32xbf16>, vector<32x32xbf16>, vector<1x32xf32> -> vector<1x32xf32>
    %79 = arith.addf %76, %78 : vector<1x32xf32>
    %80 = math.tanh %79 : vector<1x32xf32>
    %81 = arith.truncf %80 : vector<1x32xf32> to vector<1x32xbf16>
    %c0_34 = arith.constant 0 : index
    %c7 = arith.constant 7 : index
    %c0_35 = arith.constant 0 : index
    %82 = vector.load %arg6[%c0_34, %c7, %c0_35] : memref<1x16x32xbf16, #tpu.memory_space<vmem>>, vector<1x1x32xbf16>
    %83 = vector.shape_cast %82 : vector<1x1x32xbf16> to vector<1x32xbf16>
    %84 = vector.shape_cast %81 : vector<1x32xbf16> to vector<1x1x32xbf16>
    tpu.vector_store %arg6[%c0_34, %c7, %c0_35], %84 {strides = array<i32>} : memref<1x16x32xbf16, #tpu.memory_space<vmem>>, vector<1x1x32xbf16>,
    %85 = vector.extract_strided_slice %10 {offsets = [8, 0], sizes = [1, 32], strides = [1, 1]} : vector<16x32xf32> to vector<1x32xf32>
    %86 = arith.truncf %80 : vector<1x32xf32> to vector<1x32xbf16>
    %cst_36 = arith.constant dense<0.000000e+00> : vector<1x32xf32>
    %87 = tpu.matmul %86, %11, %cst_36 {dimension_numbers = #tpu.dot_dimension_numbers<[1], [0], [0], [1], [0, 0, 1, 1], [], []>} : vector<1x32xbf16>, vector<32x32xbf16>, vector<1x32xf32> -> vector<1x32xf32>
    %88 = arith.addf %85, %87 : vector<1x32xf32>
    %89 = math.tanh %88 : vector<1x32xf32>
    %90 = arith.truncf %89 : vector<1x32xf32> to vector<1x32xbf16>
    %c0_37 = arith.constant 0 : index
    %c8 = arith.constant 8 : index
    %c0_38 = arith.constant 0 : index
    %91 = vector.load %arg6[%c0_37, %c8, %c0_38] : memref<1x16x32xbf16, #tpu.memory_space<vmem>>, vector<1x1x32xbf16>
    %92 = vector.shape_cast %91 : vector<1x1x32xbf16> to vector<1x32xbf16>
    %93 = vector.shape_cast %90 : vector<1x32xbf16> to vector<1x1x32xbf16>
    tpu.vector_store %arg6[%c0_37, %c8, %c0_38], %93 {strides = array<i32>} : memref<1x16x32xbf16, #tpu.memory_space<vmem>>, vector<1x1x32xbf16>,
    %94 = vector.extract_strided_slice %10 {offsets = [9, 0], sizes = [1, 32], strides = [1, 1]} : vector<16x32xf32> to vector<1x32xf32>
    %95 = arith.truncf %89 : vector<1x32xf32> to vector<1x32xbf16>
    %cst_39 = arith.constant dense<0.000000e+00> : vector<1x32xf32>
    %96 = tpu.matmul %95, %11, %cst_39 {dimension_numbers = #tpu.dot_dimension_numbers<[1], [0], [0], [1], [0, 0, 1, 1], [], []>} : vector<1x32xbf16>, vector<32x32xbf16>, vector<1x32xf32> -> vector<1x32xf32>
    %97 = arith.addf %94, %96 : vector<1x32xf32>
    %98 = math.tanh %97 : vector<1x32xf32>
    %99 = arith.truncf %98 : vector<1x32xf32> to vector<1x32xbf16>
    %c0_40 = arith.constant 0 : index
    %c9 = arith.constant 9 : index
    %c0_41 = arith.constant 0 : index
    %100 = vector.load %arg6[%c0_40, %c9, %c0_41] : memref<1x16x32xbf16, #tpu.memory_space<vmem>>, vector<1x1x32xbf16>
    %101 = vector.shape_cast %100 : vector<1x1x32xbf16> to vector<1x32xbf16>
    %102 = vector.shape_cast %99 : vector<1x32xbf16> to vector<1x1x32xbf16>
    tpu.vector_store %arg6[%c0_40, %c9, %c0_41], %102 {strides = array<i32>} : memref<1x16x32xbf16, #tpu.memory_space<vmem>>, vector<1x1x32xbf16>,
    %103 = vector.extract_strided_slice %10 {offsets = [10, 0], sizes = [1, 32], strides = [1, 1]} : vector<16x32xf32> to vector<1x32xf32>
    %104 = arith.truncf %98 : vector<1x32xf32> to vector<1x32xbf16>
    %cst_42 = arith.constant dense<0.000000e+00> : vector<1x32xf32>
    %105 = tpu.matmul %104, %11, %cst_42 {dimension_numbers = #tpu.dot_dimension_numbers<[1], [0], [0], [1], [0, 0, 1, 1], [], []>} : vector<1x32xbf16>, vector<32x32xbf16>, vector<1x32xf32> -> vector<1x32xf32>
    %106 = arith.addf %103, %105 : vector<1x32xf32>
    %107 = math.tanh %106 : vector<1x32xf32>
    %108 = arith.truncf %107 : vector<1x32xf32> to vector<1x32xbf16>
    %c0_43 = arith.constant 0 : index
    %c10 = arith.constant 10 : index
    %c0_44 = arith.constant 0 : index
    %109 = vector.load %arg6[%c0_43, %c10, %c0_44] : memref<1x16x32xbf16, #tpu.memory_space<vmem>>, vector<1x1x32xbf16>
    %110 = vector.shape_cast %109 : vector<1x1x32xbf16> to vector<1x32xbf16>
    %111 = vector.shape_cast %108 : vector<1x32xbf16> to vector<1x1x32xbf16>
    tpu.vector_store %arg6[%c0_43, %c10, %c0_44], %111 {strides = array<i32>} : memref<1x16x32xbf16, #tpu.memory_space<vmem>>, vector<1x1x32xbf16>,
    %112 = vector.extract_strided_slice %10 {offsets = [11, 0], sizes = [1, 32], strides = [1, 1]} : vector<16x32xf32> to vector<1x32xf32>
    %113 = arith.truncf %107 : vector<1x32xf32> to vector<1x32xbf16>
    %cst_45 = arith.constant dense<0.000000e+00> : vector<1x32xf32>
    %114 = tpu.matmul %113, %11, %cst_45 {dimension_numbers = #tpu.dot_dimension_numbers<[1], [0], [0], [1], [0, 0, 1, 1], [], []>} : vector<1x32xbf16>, vector<32x32xbf16>, vector<1x32xf32> -> vector<1x32xf32>
    %115 = arith.addf %112, %114 : vector<1x32xf32>
    %116 = math.tanh %115 : vector<1x32xf32>
    %117 = arith.truncf %116 : vector<1x32xf32> to vector<1x32xbf16>
    %c0_46 = arith.constant 0 : index
    %c11 = arith.constant 11 : index
    %c0_47 = arith.constant 0 : index
    %118 = vector.load %arg6[%c0_46, %c11, %c0_47] : memref<1x16x32xbf16, #tpu.memory_space<vmem>>, vector<1x1x32xbf16>
    %119 = vector.shape_cast %118 : vector<1x1x32xbf16> to vector<1x32xbf16>
    %120 = vector.shape_cast %117 : vector<1x32xbf16> to vector<1x1x32xbf16>
    tpu.vector_store %arg6[%c0_46, %c11, %c0_47], %120 {strides = array<i32>} : memref<1x16x32xbf16, #tpu.memory_space<vmem>>, vector<1x1x32xbf16>,
    %121 = vector.extract_strided_slice %10 {offsets = [12, 0], sizes = [1, 32], strides = [1, 1]} : vector<16x32xf32> to vector<1x32xf32>
    %122 = arith.truncf %116 : vector<1x32xf32> to vector<1x32xbf16>
    %cst_48 = arith.constant dense<0.000000e+00> : vector<1x32xf32>
    %123 = tpu.matmul %122, %11, %cst_48 {dimension_numbers = #tpu.dot_dimension_numbers<[1], [0], [0], [1], [0, 0, 1, 1], [], []>} : vector<1x32xbf16>, vector<32x32xbf16>, vector<1x32xf32> -> vector<1x32xf32>
    %124 = arith.addf %121, %123 : vector<1x32xf32>
    %125 = math.tanh %124 : vector<1x32xf32>
    %126 = arith.truncf %125 : vector<1x32xf32> to vector<1x32xbf16>
    %c0_49 = arith.constant 0 : index
    %c12 = arith.constant 12 : index
    %c0_50 = arith.constant 0 : index
    %127 = vector.load %arg6[%c0_49, %c12, %c0_50] : memref<1x16x32xbf16, #tpu.memory_space<vmem>>, vector<1x1x32xbf16>
    %128 = vector.shape_cast %127 : vector<1x1x32xbf16> to vector<1x32xbf16>
    %129 = vector.shape_cast %126 : vector<1x32xbf16> to vector<1x1x32xbf16>
    tpu.vector_store %arg6[%c0_49, %c12, %c0_50], %129 {strides = array<i32>} : memref<1x16x32xbf16, #tpu.memory_space<vmem>>, vector<1x1x32xbf16>,
    %130 = vector.extract_strided_slice %10 {offsets = [13, 0], sizes = [1, 32], strides = [1, 1]} : vector<16x32xf32> to vector<1x32xf32>
    %131 = arith.truncf %125 : vector<1x32xf32> to vector<1x32xbf16>
    %cst_51 = arith.constant dense<0.000000e+00> : vector<1x32xf32>
    %132 = tpu.matmul %131, %11, %cst_51 {dimension_numbers = #tpu.dot_dimension_numbers<[1], [0], [0], [1], [0, 0, 1, 1], [], []>} : vector<1x32xbf16>, vector<32x32xbf16>, vector<1x32xf32> -> vector<1x32xf32>
    %133 = arith.addf %130, %132 : vector<1x32xf32>
    %134 = math.tanh %133 : vector<1x32xf32>
    %135 = arith.truncf %134 : vector<1x32xf32> to vector<1x32xbf16>
    %c0_52 = arith.constant 0 : index
    %c13 = arith.constant 13 : index
    %c0_53 = arith.constant 0 : index
    %136 = vector.load %arg6[%c0_52, %c13, %c0_53] : memref<1x16x32xbf16, #tpu.memory_space<vmem>>, vector<1x1x32xbf16>
    %137 = vector.shape_cast %136 : vector<1x1x32xbf16> to vector<1x32xbf16>
    %138 = vector.shape_cast %135 : vector<1x32xbf16> to vector<1x1x32xbf16>
    tpu.vector_store %arg6[%c0_52, %c13, %c0_53], %138 {strides = array<i32>} : memref<1x16x32xbf16, #tpu.memory_space<vmem>>, vector<1x1x32xbf16>,
    %139 = vector.extract_strided_slice %10 {offsets = [14, 0], sizes = [1, 32], strides = [1, 1]} : vector<16x32xf32> to vector<1x32xf32>
    %140 = arith.truncf %134 : vector<1x32xf32> to vector<1x32xbf16>
    %cst_54 = arith.constant dense<0.000000e+00> : vector<1x32xf32>
    %141 = tpu.matmul %140, %11, %cst_54 {dimension_numbers = #tpu.dot_dimension_numbers<[1], [0], [0], [1], [0, 0, 1, 1], [], []>} : vector<1x32xbf16>, vector<32x32xbf16>, vector<1x32xf32> -> vector<1x32xf32>
    %142 = arith.addf %139, %141 : vector<1x32xf32>
    %143 = math.tanh %142 : vector<1x32xf32>
    %144 = arith.truncf %143 : vector<1x32xf32> to vector<1x32xbf16>
    %c0_55 = arith.constant 0 : index
    %c14 = arith.constant 14 : index
    %c0_56 = arith.constant 0 : index
    %145 = vector.load %arg6[%c0_55, %c14, %c0_56] : memref<1x16x32xbf16, #tpu.memory_space<vmem>>, vector<1x1x32xbf16>
    %146 = vector.shape_cast %145 : vector<1x1x32xbf16> to vector<1x32xbf16>
    %147 = vector.shape_cast %144 : vector<1x32xbf16> to vector<1x1x32xbf16>
    tpu.vector_store %arg6[%c0_55, %c14, %c0_56], %147 {strides = array<i32>} : memref<1x16x32xbf16, #tpu.memory_space<vmem>>, vector<1x1x32xbf16>,
    %148 = vector.extract_strided_slice %10 {offsets = [15, 0], sizes = [1, 32], strides = [1, 1]} : vector<16x32xf32> to vector<1x32xf32>
    %149 = arith.truncf %143 : vector<1x32xf32> to vector<1x32xbf16>
    %cst_57 = arith.constant dense<0.000000e+00> : vector<1x32xf32>
    %150 = tpu.matmul %149, %11, %cst_57 {dimension_numbers = #tpu.dot_dimension_numbers<[1], [0], [0], [1], [0, 0, 1, 1], [], []>} : vector<1x32xbf16>, vector<32x32xbf16>, vector<1x32xf32> -> vector<1x32xf32>
    %151 = arith.addf %148, %150 : vector<1x32xf32>
    %152 = math.tanh %151 : vector<1x32xf32>
    %153 = arith.truncf %152 : vector<1x32xf32> to vector<1x32xbf16>
    %c0_58 = arith.constant 0 : index
    %c15 = arith.constant 15 : index
    %c0_59 = arith.constant 0 : index
    %154 = vector.load %arg6[%c0_58, %c15, %c0_59] : memref<1x16x32xbf16, #tpu.memory_space<vmem>>, vector<1x1x32xbf16>
    %155 = vector.shape_cast %154 : vector<1x1x32xbf16> to vector<1x32xbf16>
    %156 = vector.shape_cast %153 : vector<1x32xbf16> to vector<1x1x32xbf16>
    tpu.vector_store %arg6[%c0_58, %c15, %c0_59], %156 {strides = array<i32>} : memref<1x16x32xbf16, #tpu.memory_space<vmem>>, vector<1x1x32xbf16>,
    %c0_60 = arith.constant 0 : index
    %c0_61 = arith.constant 0 : index
    %157 = vector.load %arg7[%c0_60, %c0_61] : memref<1x32xf32, #tpu.memory_space<vmem>>, vector<1x32xf32>
    tpu.vector_store %arg7[%c0_60, %c0_61], %152 {strides = array<i32>} : memref<1x32xf32, #tpu.memory_space<vmem>>, vector<1x32xf32>,
    return
  }
  func.func @transform_0(%arg0: i32, %arg1: i32) -> (i32, i32, i32) {
    %c0_i32 = arith.constant 0 : i32
    %c0_i32_0 = arith.constant 0 : i32
    return %arg0, %arg1, %c0_i32 : i32, i32, i32
  }
  func.func @transform_1(%arg0: i32, %arg1: i32) -> (i32, i32) {
    %c0_i32 = arith.constant 0 : i32
    %c0_i32_0 = arith.constant 0 : i32
    %c0_i32_1 = arith.constant 0 : i32
    return %c0_i32, %c0_i32_0 : i32, i32
  }
  func.func @transform_2(%arg0: i32, %arg1: i32) -> (i32, i32) {
    %c0_i32 = arith.constant 0 : i32
    %c0_i32_0 = arith.constant 0 : i32
    %c0_i32_1 = arith.constant 0 : i32
    return %c0_i32, %c0_i32_0 : i32, i32
  }
  func.func @transform_3(%arg0: i32, %arg1: i32) -> (i32, i32) {
    %c0_i32 = arith.constant 0 : i32
    %c0_i32_0 = arith.constant 0 : i32
    %c0_i32_1 = arith.constant 0 : i32
    return %c0_i32, %c0_i32_0 : i32, i32
  }
  func.func @transform_4(%arg0: i32, %arg1: i32) -> (i32, i32, i32) {
    %c0_i32 = arith.constant 0 : i32
    %c0_i32_0 = arith.constant 0 : i32
    return %arg0, %arg1, %c0_i32 : i32, i32, i32
  }
}

</mosaic_0001>

<llo_original>
// kernel: tpu_custom_call.1
$region0: #{tpu_custom_call.1}
  #allocation0 [shape = 'u32[]', space=smem, size = 0x4, offset = 0x4, fixed_abs, tag = 'smem constant byte address 0x4 - core index']
  #allocation1 [shape = 'u32[72,128]{1,0:T(1,128)}', space=vmem, size = 0x9000, scoped, tag = 'internal scratch']
  #allocation2 [shape = 'f32[1,32]{1,0:T(1,128)}', space=vmem, size = 0x200, scoped, tag = 'scratch operand']
  %s0 = inlined_call_operand.vmem [shape: f32[2,48,16], index: 0, kind: input, shape index: {}]
  %s1 = inlined_call_operand.vmem [shape: bf16[16,32], index: 1, kind: input, shape index: {}]
  %s2 = inlined_call_operand.vmem [shape: bf16[32,32], index: 2, kind: input, shape index: {}]
  %s3 = inlined_call_operand.vmem [shape: f32[1,32], index: 3, kind: input, shape index: {}]
  %s4 = inlined_call_operand.vmem [shape: bf16[2,48,32], index: 4, kind: output, shape index: {}]
  %s5 = sld [smem:[#allocation0]]
  $region53: #{tpu_custom_call.1} parent=0
    _
  %s7 = ssub.s32 1, %s5
  %s8 = scalar_select 0, %s7, %s5
  loop: start=0, step=1, limit=8
  $region2: #{tpu_custom_call.1} parent=0 // loop_pre_header
    _
  $region3: #{tpu_custom_call.1} parent=0 // loop_header
    %s10 = sphi 0, %s14
    %p11 = scmp.ge.s32.totalorder %s10, 8
    %s17 = sphi 0, %s29
    %s18 = sphi 0, %s25
    %s19 = sphi 0, %s17
    %s20 = sphi 0, %s18
    %s21 = sphi 0, %s19
    %s22 = sphi 0, %s20
    %s34 = sphi 0, %s36
    %s37 = sphi 0, %s34
    %s38 = sphi 0, %s37
    %s54 = sphi 0, %s38
    %s58 = sphi 0, %s58
    %s60 = sphi 0, %s58
    %s61 = sphi 0, %s60
    %s75 = sphi 0, %s61
    %s79 = sphi 0, %s79
    %s81 = sphi 0, %s79
    %s82 = sphi 0, %s81
    %s96 = sphi 0, %s82
    %s100 = sphi 0, %s100
    %s102 = sphi 0, %s100
    %s103 = sphi 0, %s102
    %s117 = sphi 0, %s103
    %s125 = sphi 0, %s127
    %s128 = sphi 0, %s125
    %s129 = sphi 0, %s128
    %s145 = sphi 0, %s129
  $region4: #{tpu_custom_call.1} parent=0 // loop_header_branch
    %13 = sbr.rel (%p11) target = $region8
  $region5: #{tpu_custom_call.1} parent=0 // loop_body
    %s15 = ssub.s32 %s10, 1
    %s16 = ssub.s32 %s10, 2
    %s23 = sadd.s32 1, %s18
    %p24 = scmp.ge.s32.totalorder %s23, 3
    %s25 = scalar_select %p24, 0, %s23
    %s26 = sadd.s32 1, %s17
    %s27 = scalar_select %p24, %s26, %s17
    %p28 = scmp.ge.s32.totalorder %s27, 2
    %s29 = scalar_select %p28, 0, %s27
    %s30 = ssub.s32 %s17, %s29
    %s31 = ssub.s32 %s18, %s25
    %s32 = sor.u32 %s30, %s31
    %p33 = scmp.eq.s32.totalorder %s32, 0
    %s35 = sadd.s32 %s34, 1
    %s36 = scalar_select %p33, %s34, %s35
    %p39 = pneg %p33
    %p40 = scmp.eq.s32.totalorder %s10, 5
    %p41 = por %p39, %p40
    %p42 = scmp.ne.s32.totalorder %s34, %s37
    %p43 = scmp.eq.s32.totalorder %s10, 0
    %p44 = por %p42, %p43
    %p45 = scmp.ne.s32.totalorder %s34, %s37
    %p46 = scmp.eq.s32.totalorder %s15, 5
    %p47 = por %p45, %p46
    %p48 = scmp.ne.s32.totalorder %s37, %s38
    %p49 = scmp.eq.s32.totalorder %s15, 0
    %p50 = por %p48, %p49
    %p51 = scmp.ne.s32.totalorder %s37, %s38
    %p52 = scmp.eq.s32.totalorder %s16, 5
    %p53 = por %p51, %p52
    %p55 = scmp.ne.s32.totalorder %s38, %s54
    %p56 = scmp.eq.s32.totalorder %s16, 0
    %p57 = por %p55, %p56
    %s59 = sadd.s32 %s58, 1
    %p62 = scmp.eq.s32.totalorder %s10, 5
    %p63 = scmp.ne.s32.totalorder %s58, %s60
    %p64 = scmp.eq.s32.totalorder %s10, 0
    %p65 = por %p63, %p64
    %p66 = scmp.ne.s32.totalorder %s58, %s60
    %p67 = scmp.eq.s32.totalorder %s15, 5
    %p68 = por %p66, %p67
    %p69 = scmp.ne.s32.totalorder %s60, %s61
    %p70 = scmp.eq.s32.totalorder %s15, 0
    %p71 = por %p69, %p70
    %p72 = scmp.ne.s32.totalorder %s60, %s61
    %p73 = scmp.eq.s32.totalorder %s16, 5
    %p74 = por %p72, %p73
    %p76 = scmp.ne.s32.totalorder %s61, %s75
    %p77 = scmp.eq.s32.totalorder %s16, 0
    %p78 = por %p76, %p77
    %s80 = sadd.s32 %s79, 1
    %p83 = scmp.eq.s32.totalorder %s10, 5
    %p84 = scmp.ne.s32.totalorder %s79, %s81
    %p85 = scmp.eq.s32.totalorder %s10, 0
    %p86 = por %p84, %p85
    %p87 = scmp.ne.s32.totalorder %s79, %s81
    %p88 = scmp.eq.s32.totalorder %s15, 5
    %p89 = por %p87, %p88
    %p90 = scmp.ne.s32.totalorder %s81, %s82
    %p91 = scmp.eq.s32.totalorder %s15, 0
    %p92 = por %p90, %p91
    %p93 = scmp.ne.s32.totalorder %s81, %s82
    %p94 = scmp.eq.s32.totalorder %s16, 5
    %p95 = por %p93, %p94
    %p97 = scmp.ne.s32.totalorder %s82, %s96
    %p98 = scmp.eq.s32.totalorder %s16, 0
    %p99 = por %p97, %p98
    %s101 = sadd.s32 %s100, 1
    %p104 = scmp.eq.s32.totalorder %s10, 5
    %p105 = scmp.ne.s32.totalorder %s100, %s102
    %p106 = scmp.eq.s32.totalorder %s10, 0
    %p107 = por %p105, %p106
    %p108 = scmp.ne.s32.totalorder %s100, %s102
    %p109 = scmp.eq.s32.totalorder %s15, 5
    %p110 = por %p108, %p109
    %p111 = scmp.ne.s32.totalorder %s102, %s103
    %p112 = scmp.eq.s32.totalorder %s15, 0
    %p113 = por %p111, %p112
    %p114 = scmp.ne.s32.totalorder %s102, %s103
    %p115 = scmp.eq.s32.totalorder %s16, 5
    %p116 = por %p114, %p115
    %p118 = scmp.ne.s32.totalorder %s103, %s117
    %p119 = scmp.eq.s32.totalorder %s16, 0
    %p120 = por %p118, %p119
    %s121 = ssub.s32 %s17, %s29
    %s122 = ssub.s32 %s18, %s25
    %s123 = sor.u32 %s121, %s122
    %p124 = scmp.eq.s32.totalorder %s123, 0
    %s126 = sadd.s32 %s125, 1
    %s127 = scalar_select %p124, %s125, %s126
    %p130 = pneg %p124
    %p131 = scmp.eq.s32.totalorder %s10, 5
    %p132 = por %p130, %p131
    %p133 = scmp.ne.s32.totalorder %s125, %s128
    %p134 = scmp.eq.s32.totalorder %s10, 0
    %p135 = por %p133, %p134
    %p136 = scmp.ne.s32.totalorder %s125, %s128
    %p137 = scmp.eq.s32.totalorder %s15, 5
    %p138 = por %p136, %p137
    %p139 = scmp.ne.s32.totalorder %s128, %s129
    %p140 = scmp.eq.s32.totalorder %s15, 0
    %p141 = por %p139, %p140
    %p142 = scmp.ne.s32.totalorder %s128, %s129
    %p143 = scmp.eq.s32.totalorder %s16, 5
    %p144 = por %p142, %p143
    %p146 = scmp.ne.s32.totalorder %s129, %s145
    %p147 = scmp.eq.s32.totalorder %s16, 0
    %p148 = por %p146, %p147
    %p149 = scmp.le.s32.totalorder 1, %s10
    %p150 = scmp.lt.s32.totalorder %s10, 7
    %p151 = pnand %p149, %p150
    %p152 = pneg %p151
    // Predicated region
    $region9: #{tpu_custom_call.1} parent=5 // pred_check
      _
    $region10: #{tpu_custom_call.1} parent=5 // pred_check_branch
      %154 = sbr.rel (%p151) target = $region12
    $region11: #{tpu_custom_call.1} parent=5 // pred_region
      %s155 = ssub.s32 %s10, 1
      // Predicated region
      $region13: #{tpu_custom_call.1} parent=11 // pred_check
        %p156 = pneg %p71
      $region14: #{tpu_custom_call.1} parent=11 // pred_check_branch
        %158 = sbr.rel (%p156) target = $region16
      $region15: #{tpu_custom_call.1} parent=11 // pred_region
        _
      $region16: #{tpu_custom_call.1} parent=11 // pred_fallthru
        _
      // Predicated region
      $region17: #{tpu_custom_call.1} parent=11 // pred_check
        %p159 = pneg %p92
      $region18: #{tpu_custom_call.1} parent=11 // pred_check_branch
        %161 = sbr.rel (%p159) target = $region20
      $region19: #{tpu_custom_call.1} parent=11 // pred_region
        _
      $region20: #{tpu_custom_call.1} parent=11 // pred_fallthru
        _
      // Predicated region
      $region21: #{tpu_custom_call.1} parent=11 // pred_check
        %p162 = pneg %p113
      $region22: #{tpu_custom_call.1} parent=11 // pred_check_branch
        %164 = sbr.rel (%p162) target = $region24
      $region23: #{tpu_custom_call.1} parent=11 // pred_region
        _
      $region24: #{tpu_custom_call.1} parent=11 // pred_fallthru
        _
    $region12: #{tpu_custom_call.1} parent=5 // pred_fallthru
      _
    %p165 = scmp.lt.s32.totalorder %s10, 6
    // Predicated region
    $region25: #{tpu_custom_call.1} parent=5 // pred_check
      %p166 = pneg %p165
    $region26: #{tpu_custom_call.1} parent=5 // pred_check_branch
      %168 = sbr.rel (%p166) target = $region28
    $region27: #{tpu_custom_call.1} parent=5 // pred_region
      // Predicated region
      $region29: #{tpu_custom_call.1} parent=27 // pred_check
        %p169 = pneg %p44
      $region30: #{tpu_custom_call.1} parent=27 // pred_check_branch
        %171 = sbr.rel (%p169) target = $region32
      $region31: #{tpu_custom_call.1} parent=27 // pred_region
        %s172 = smul.u32 2, %s18
        %p173 = scmp.lt.s32.totalorder %s17, 1
        %s174 = scalar_select %p173, %s17, 1
        %p175 = scmp.lt.s32.totalorder %s172, 5
        %s176 = scalar_select %p175, %s172, 5
        %s177 = smul.addr %s174, 6
        %s178 = sadd.s32 %s176, %s177
        %s179 = smul.addr %s178, 8
        %s180 = scalar_lea.vmem %s0, %s179
        %s181 = smul.u32 2, %s18
      $region32: #{tpu_custom_call.1} parent=27 // pred_fallthru
        _
    $region28: #{tpu_custom_call.1} parent=5 // pred_fallthru
      _
    %p182 = scmp.le.s32.totalorder 1, %s10
    %p183 = scmp.lt.s32.totalorder %s10, 7
    %p184 = pnand %p182, %p183
    %p185 = pneg %p184
    // Predicated region
    $region33: #{tpu_custom_call.1} parent=5 // pred_check
      _
    $region34: #{tpu_custom_call.1} parent=5 // pred_check_branch
      %187 = sbr.rel (%p184) target = $region36
    $region35: #{tpu_custom_call.1} parent=5 // pred_region
      %s188 = ssub.s32 %s10, 1
      %s189 = smul.u32 2, %s20
      %p190 = scmp.lt.s32.totalorder %s19, 1
      %s191 = scalar_select %p190, %s19, 1
      %p192 = scmp.lt.s32.totalorder %s189, 5
      %s193 = scalar_select %p192, %s189, 5
      %s194 = smul.addr %s191, 6
      %s195 = sadd.s32 %s193, %s194
      %s196 = smul.addr %s195, 8
      %s197 = scalar_lea.vmem %s0, %s196
      %p198 = pneg %p50
      %p199 = pneg %p47
      %p200 = pneg %p71
      %p201 = pneg %p68
      %p202 = pneg %p92
      %p203 = pneg %p89
      %p204 = pneg %p113
      %p205 = pneg %p110
      %p206 = pneg %p141
      %p207 = pneg %p138
      %s208 = smul.u32 2, %s20
      %p209 = scmp.lt.s32.totalorder %s19, 1
      %s210 = scalar_select %p209, %s19, 1
      %p211 = scmp.lt.s32.totalorder %s208, 5
      %s212 = scalar_select %p211, %s208, 5
      %s213 = smul.addr %s210, 6
      %s214 = sadd.s32 %s212, %s213
      %s215 = smul.addr %s214, 4
      %s216 = scalar_lea.vmem %s4, %s215
      %s217 = smul.u32 2, %s20
      %p218 = scmp.lt.s32.totalorder %s19, 1
      %s219 = scalar_select %p218, %s19, 1
      %p220 = scmp.lt.s32.totalorder %s217, 5
      %s221 = scalar_select %p220, %s217, 5
      %s222 = smul.addr %s219, 6
      %s223 = sadd.s32 %s221, %s222
      %s224 = smul.addr %s223, 8
      %s225 = scalar_lea.vmem %s0, %s224
      %s226 = smul.u32 2, %s20
      %s227 = smul.u32 2, %s20
      %p228 = scmp.lt.s32.totalorder %s19, 1
      %s229 = scalar_select %p228, %s19, 1
      %p230 = scmp.lt.s32.totalorder %s227, 5
      %s231 = scalar_select %p230, %s227, 5
      %s232 = smul.addr %s229, 6
      %s233 = sadd.s32 %s231, %s232
      %s234 = smul.addr %s233, 4
      %s235 = scalar_lea.vmem %s4, %s234
      %s236 = smul.u32 2, %s20
      %p238 = scmp.eq.s32.totalorder %s20, 0
      // Predicated region
      $region37: #{tpu_custom_call.1} parent=35 // pred_check
        %p239 = pneg %p238
      $region38: #{tpu_custom_call.1} parent=35 // pred_check_branch
        %241 = sbr.rel (%p239) target = $region40
      $region39: #{tpu_custom_call.1} parent=35 // pred_region
        %vm242 = vcmask 253952
        %243 = vst.msk [vmem:[#allocation2] sm:$0x1] %vm242, 0.0
      $region40: #{tpu_custom_call.1} parent=35 // pred_fallthru
        _
      %v244 = vld [vmem:[%s225] sm:$0xff]
      %v245 = vld [vmem:[%s225 + $0x8] sm:$0xff]
      %v246 = vpack.c.bf16 %v245, %v244
      %v247 = vld [vmem:[%s1] sm:$0xf]
      %v248 = vld [vmem:[%s1 + $0x4] sm:$0xf]
      %v249 = vld [vmem:[%s3] sm:$0x1]
      %v251 = vperm.slane %v249, 0
      %v255 = vunpack.c.l.b16 %v247
      %v256 = vunpack.c.l.b16 %v248
      %v257 = vpack.c.b16 %v256, %v255
      %vm259 = vcmask 130048
      %v261 = vsel %vm259, %v246, 0
      %263 = vmatpush.bf16.msra.mxu0 0
      %264 = vmatpush.bf16.msra.mxu0 0
      %265 = vmatpush.bf16.msra.mxu0 0
      %266 = vmatpush.bf16.msra.mxu0 0
      %267 = vmatpush.bf16.msra.mxu0 0
      %268 = vmatpush.bf16.msra.mxu0 0
      %269 = vmatpush.bf16.msra.mxu0 0
      %270 = vmatpush.bf16.msra.mxu0 %v257
      %271 = vmatmul.bf16.gmra.mxu0 %v261
      %v272 = vpop.f32.mrf.mxu0
      %v273 = vadd.f32 %v251, %v272
      %v274 = vpop.f32.mrf.mxu0
      %v275 = vadd.f32 %v251, %v274
      %276 = vdwg.mxu0
      %v277 = vld [vmem:[%s2] sm:$0xf]
      %v278 = vld [vmem:[%s2 + $0x4] sm:$0xf]
      %v279 = vld [vmem:[%s2 + $0x8] sm:$0xf]
      %v280 = vld [vmem:[%s2 + $0xc] sm:$0xf]
      %v281 = vld [vmem:[#allocation2] sm:$0x1]
      %v282 = vpack.c.bf16 %v281, %v281
      %v287 = vunpack.c.l.b16 %v277
      %v288 = vunpack.c.l.b16 %v278
      %v289 = vunpack.c.l.b16 %v279
      %v290 = vunpack.c.l.b16 %v280
      %v291 = vpack.c.b16 %v288, %v287
      %v292 = vpack.c.b16 %v290, %v289
      %vm295 = vcmask 261120
      %v297 = vsel %vm295, %v282, 0
      %299 = vmatpush.bf16.msra.mxu0 0
      %300 = vmatpush.bf16.msra.mxu0 0
      %301 = vmatpush.bf16.msra.mxu0 0
      %302 = vmatpush.bf16.msra.mxu0 0
      %303 = vmatpush.bf16.msra.mxu0 0
      %304 = vmatpush.bf16.msra.mxu0 0
      %305 = vmatpush.bf16.msra.mxu0 %v292
      %306 = vmatpush.bf16.msra.mxu0 %v291
      %307 = vmatmul.bf16.gmra.mxu0 %v297
      %v308 = vpop.f32.mrf.mxu0
      %v309 = vadd.f32 0.0, %v308
      %v310 = vpop.f32.mrf.mxu0
      %311 = vdwg.mxu0
      %v312 = vadd.f32 %v273, %v309
      %v313 = vtanh.pop %v312
      %v314 = vpack.c.bf16 %v313, %v313
      %vm315 = vcmask 253952
      %vm316 = vsmask.f32 256
      %vm317 = vmand %vm315, %vm316
      %v318 = vld [vmem:[%s235] sm:$0x1]
      %v319 = vsel %vm317, %v314, %v318
      %320 = vst [vmem:[%s235] sm:$0x1] %v319
      %v322 = vsel %vm295, %v314, 0
      %324 = vmatpush.bf16.msra.mxu0 0
      %325 = vmatpush.bf16.msra.mxu0 0
      %326 = vmatpush.bf16.msra.mxu0 0
      %327 = vmatpush.bf16.msra.mxu0 0
      %328 = vmatpush.bf16.msra.mxu0 0
      %329 = vmatpush.bf16.msra.mxu0 0
      %330 = vmatpush.bf16.msra.mxu0 %v292
      %331 = vmatpush.bf16.msra.mxu0 %v291
      %332 = vmatmul.bf16.gmra.mxu0 %v322
      %v333 = vpop.f32.mrf.mxu0
      %v334 = vadd.f32 0.0, %v333
      %v335 = vpop.f32.mrf.mxu0
      %336 = vdwg.mxu0
      %v338 = vrot.slane %v334, 7
      %v340 = vadd.f32 %v273, %v338
      %v341 = vtanh.pop %v340
      %v342 = vpack.c.bf16 %v341, %v341
      %vm343 = vsmask.f32 7938
      %vm344 = vmand %vm315, %vm343
      %v345 = vld [vmem:[%s235] sm:$0x1]
      %v346 = vsel %vm344, %v342, %v345
      %347 = vst [vmem:[%s235] sm:$0x1] %v346
      %v349 = vunpack.c.l.b16 %v342
      %v350 = vpack.c.b16 %v349, %v349
      %v352 = vshrl.u32 %v350, 16
      %v355 = vsel %vm295, %v352, 0
      %357 = vmatpush.bf16.msra.mxu0 0
      %358 = vmatpush.bf16.msra.mxu0 0
      %359 = vmatpush.bf16.msra.mxu0 0
      %360 = vmatpush.bf16.msra.mxu0 0
      %361 = vmatpush.bf16.msra.mxu0 0
      %362 = vmatpush.bf16.msra.mxu0 0
      %363 = vmatpush.bf16.msra.mxu0 %v292
      %364 = vmatpush.bf16.msra.mxu0 %v291
      %365 = vmatmul.bf16.gmra.mxu0 %v355
      %v366 = vpop.f32.mrf.mxu0
      %v367 = vadd.f32 0.0, %v366
      %v368 = vpop.f32.mrf.mxu0
      %369 = vdwg.mxu0
      %v371 = vrot.slane %v367, 6
      %v373 = vadd.f32 %v273, %v371
      %v374 = vtanh.pop %v373
      %v375 = vpack.c.bf16 %v374, %v374
      %vm376 = vcmask 254977
      %vm377 = vsmask.f32 1280
      %vm378 = vmand %vm376, %vm377
      %v379 = vld [vmem:[%s235] sm:$0x2]
      %v380 = vsel %vm378, %v375, %v379
      %381 = vst [vmem:[%s235] sm:$0x2] %v380
      %v383 = vunpack.c.l.b16 %v375
      %v384 = vpack.c.b16 %v383, %v383
      %v385 = vrot.slane %v384, 1
      %v387 = vsel %vm295, %v385, 0
      %389 = vmatpush.bf16.msra.mxu0 0
      %390 = vmatpush.bf16.msra.mxu0 0
      %391 = vmatpush.bf16.msra.mxu0 0
      %392 = vmatpush.bf16.msra.mxu0 0
      %393 = vmatpush.bf16.msra.mxu0 0
      %394 = vmatpush.bf16.msra.mxu0 0
      %395 = vmatpush.bf16.msra.mxu0 %v292
      %396 = vmatpush.bf16.msra.mxu0 %v291
      %397 = vmatmul.bf16.gmra.mxu0 %v387
      %v398 = vpop.f32.mrf.mxu0
      %v399 = vadd.f32 0.0, %v398
      %v400 = vpop.f32.mrf.mxu0
      %401 = vdwg.mxu0
      %v403 = vrot.slane %v399, 5
      %v405 = vadd.f32 %v273, %v403
      %v406 = vtanh.pop %v405
      %v407 = vpack.c.bf16 %v406, %v406
      %vm408 = vsmask.f32 7942
      %vm409 = vmand %vm376, %vm408
      %v410 = vld [vmem:[%s235] sm:$0x2]
      %v411 = vsel %vm409, %v407, %v410
      %412 = vst [vmem:[%s235] sm:$0x2] %v411
      %v414 = vunpack.c.l.b16 %v407
      %v415 = vpack.c.b16 %v414, %v414
      %v417 = vshrl.u32 %v415, 16
      %v419 = vrot.slane %v417, 1
      %v421 = vsel %vm295, %v419, 0
      %423 = vmatpush.bf16.msra.mxu0 0
      %424 = vmatpush.bf16.msra.mxu0 0
      %425 = vmatpush.bf16.msra.mxu0 0
      %426 = vmatpush.bf16.msra.mxu0 0
      %427 = vmatpush.bf16.msra.mxu0 0
      %428 = vmatpush.bf16.msra.mxu0 0
      %429 = vmatpush.bf16.msra.mxu0 %v292
      %430 = vmatpush.bf16.msra.mxu0 %v291
      %431 = vmatmul.bf16.gmra.mxu0 %v421
      %v432 = vpop.f32.mrf.mxu0
      %v433 = vadd.f32 0.0, %v432
      %v434 = vpop.f32.mrf.mxu0
      %435 = vdwg.mxu0
      %v437 = vrot.slane %v433, 4
      %v439 = vadd.f32 %v273, %v437
      %v440 = vtanh.pop %v439
      %v441 = vpack.c.bf16 %v440, %v440
      %vm442 = vcmask 256002
      %vm443 = vsmask.f32 2304
      %vm444 = vmand %vm442, %vm443
      %v445 = vld [vmem:[%s235] sm:$0x4]
      %v446 = vsel %vm444, %v441, %v445
      %447 = vst [vmem:[%s235] sm:$0x4] %v446
      %v449 = vunpack.c.l.b16 %v441
      %v450 = vpack.c.b16 %v449, %v449
      %v451 = vrot.slane %v450, 2
      %v453 = vsel %vm295, %v451, 0
      %455 = vmatpush.bf16.msra.mxu0 0
      %456 = vmatpush.bf16.msra.mxu0 0
      %457 = vmatpush.bf16.msra.mxu0 0
      %458 = vmatpush.bf16.msra.mxu0 0
      %459 = vmatpush.bf16.msra.mxu0 0
      %460 = vmatpush.bf16.msra.mxu0 0
      %461 = vmatpush.bf16.msra.mxu0 %v292
      %462 = vmatpush.bf16.msra.mxu0 %v291
      %463 = vmatmul.bf16.gmra.mxu0 %v453
      %v464 = vpop.f32.mrf.mxu0
      %v465 = vadd.f32 0.0, %v464
      %v466 = vpop.f32.mrf.mxu0
      %467 = vdwg.mxu0
      %v469 = vrot.slane %v465, 3
      %v471 = vadd.f32 %v273, %v469
      %v472 = vtanh.pop %v471
      %v473 = vpack.c.bf16 %v472, %v472
      %vm474 = vsmask.f32 7946
      %vm475 = vmand %vm442, %vm474
      %v476 = vld [vmem:[%s235] sm:$0x4]
      %v477 = vsel %vm475, %v473, %v476
      %478 = vst [vmem:[%s235] sm:$0x4] %v477
      %v480 = vunpack.c.l.b16 %v473
      %v481 = vpack.c.b16 %v480, %v480
      %v483 = vshrl.u32 %v481, 16
      %v485 = vrot.slane %v483, 2
      %v487 = vsel %vm295, %v485, 0
      %489 = vmatpush.bf16.msra.mxu0 0
      %490 = vmatpush.bf16.msra.mxu0 0
      %491 = vmatpush.bf16.msra.mxu0 0
      %492 = vmatpush.bf16.msra.mxu0 0
      %493 = vmatpush.bf16.msra.mxu0 0
      %494 = vmatpush.bf16.msra.mxu0 0
      %495 = vmatpush.bf16.msra.mxu0 %v292
      %496 = vmatpush.bf16.msra.mxu0 %v291
      %497 = vmatmul.bf16.gmra.mxu0 %v487
      %v498 = vpop.f32.mrf.mxu0
      %v499 = vadd.f32 0.0, %v498
      %v500 = vpop.f32.mrf.mxu0
      %501 = vdwg.mxu0
      %v503 = vrot.slane %v499, 2
      %v505 = vadd.f32 %v273, %v503
      %v506 = vtanh.pop %v505
      %v507 = vpack.c.bf16 %v506, %v506
      %vm508 = vcmask 257027
      %vm509 = vsmask.f32 3328
      %vm510 = vmand %vm508, %vm509
      %v511 = vld [vmem:[%s235] sm:$0x8]
      %v512 = vsel %vm510, %v507, %v511
      %513 = vst [vmem:[%s235] sm:$0x8] %v512
      %v515 = vunpack.c.l.b16 %v507
      %v516 = vpack.c.b16 %v515, %v515
      %v517 = vrot.slane %v516, 3
      %v519 = vsel %vm295, %v517, 0
      %521 = vmatpush.bf16.msra.mxu0 0
      %522 = vmatpush.bf16.msra.mxu0 0
      %523 = vmatpush.bf16.msra.mxu0 0
      %524 = vmatpush.bf16.msra.mxu0 0
      %525 = vmatpush.bf16.msra.mxu0 0
      %526 = vmatpush.bf16.msra.mxu0 0
      %527 = vmatpush.bf16.msra.mxu0 %v292
      %528 = vmatpush.bf16.msra.mxu0 %v291
      %529 = vmatmul.bf16.gmra.mxu0 %v519
      %v530 = vpop.f32.mrf.mxu0
      %v531 = vadd.f32 0.0, %v530
      %v532 = vpop.f32.mrf.mxu0
      %533 = vdwg.mxu0
      %v535 = vrot.slane %v531, 1
      %v537 = vadd.f32 %v273, %v535
      %v538 = vtanh.pop %v537
      %v539 = vpack.c.bf16 %v538, %v538
      %vm540 = vsmask.f32 7950
      %vm541 = vmand %vm508, %vm540
      %v542 = vld [vmem:[%s235] sm:$0x8]
      %v543 = vsel %vm541, %v539, %v542
      %544 = vst [vmem:[%s235] sm:$0x8] %v543
      %v546 = vunpack.c.l.b16 %v539
      %v547 = vpack.c.b16 %v546, %v546
      %v549 = vshrl.u32 %v547, 16
      %v551 = vrot.slane %v549, 3
      %v553 = vsel %vm295, %v551, 0
      %555 = vmatpush.bf16.msra.mxu0 0
      %556 = vmatpush.bf16.msra.mxu0 0
      %557 = vmatpush.bf16.msra.mxu0 0
      %558 = vmatpush.bf16.msra.mxu0 0
      %559 = vmatpush.bf16.msra.mxu0 0
      %560 = vmatpush.bf16.msra.mxu0 0
      %561 = vmatpush.bf16.msra.mxu0 %v292
      %562 = vmatpush.bf16.msra.mxu0 %v291
      %563 = vmatmul.bf16.gmra.mxu0 %v553
      %v564 = vpop.f32.mrf.mxu0
      %v565 = vadd.f32 0.0, %v564
      %v566 = vpop.f32.mrf.mxu0
      %567 = vdwg.mxu0
      %v568 = vadd.f32 %v275, %v565
      %v569 = vtanh.pop %v568
      %v570 = vpack.c.bf16 %v569, %v569
      %v571 = vld [vmem:[%s235 + $0x4] sm:$0x1]
      %v572 = vsel %vm317, %v570, %v571
      %573 = vst [vmem:[%s235 + $0x4] sm:$0x1] %v572
      %v575 = vsel %vm295, %v570, 0
      %577 = vmatpush.bf16.msra.mxu0 0
      %578 = vmatpush.bf16.msra.mxu0 0
      %579 = vmatpush.bf16.msra.mxu0 0
      %580 = vmatpush.bf16.msra.mxu0 0
      %581 = vmatpush.bf16.msra.mxu0 0
      %582 = vmatpush.bf16.msra.mxu0 0
      %583 = vmatpush.bf16.msra.mxu0 %v292
      %584 = vmatpush.bf16.msra.mxu0 %v291
      %585 = vmatmul.bf16.gmra.mxu0 %v575
      %v586 = vpop.f32.mrf.mxu0
      %v587 = vadd.f32 0.0, %v586
      %v588 = vpop.f32.mrf.mxu0
      %589 = vdwg.mxu0
      %v591 = vrot.slane %v587, 7
      %v593 = vadd.f32 %v275, %v591
      %v594 = vtanh.pop %v593
      %v595 = vpack.c.bf16 %v594, %v594
      %v596 = vld [vmem:[%s235 + $0x4] sm:$0x1]
      %v597 = vsel %vm344, %v595, %v596
      %598 = vst [vmem:[%s235 + $0x4] sm:$0x1] %v597
      %v600 = vunpack.c.l.b16 %v595
      %v601 = vpack.c.b16 %v600, %v600
      %v603 = vshrl.u32 %v601, 16
      %v606 = vsel %vm295, %v603, 0
      %608 = vmatpush.bf16.msra.mxu0 0
      %609 = vmatpush.bf16.msra.mxu0 0
      %610 = vmatpush.bf16.msra.mxu0 0
      %611 = vmatpush.bf16.msra.mxu0 0
      %612 = vmatpush.bf16.msra.mxu0 0
      %613 = vmatpush.bf16.msra.mxu0 0
      %614 = vmatpush.bf16.msra.mxu0 %v292
      %615 = vmatpush.bf16.msra.mxu0 %v291
      %616 = vmatmul.bf16.gmra.mxu0 %v606
      %v617 = vpop.f32.mrf.mxu0
      %v618 = vadd.f32 0.0, %v617
      %v619 = vpop.f32.mrf.mxu0
      %620 = vdwg.mxu0
      %v622 = vrot.slane %v618, 6
      %v624 = vadd.f32 %v275, %v622
      %v625 = vtanh.pop %v624
      %v626 = vpack.c.bf16 %v625, %v625
      %v627 = vld [vmem:[%s235 + $0x4] sm:$0x2]
      %v628 = vsel %vm378, %v626, %v627
      %629 = vst [vmem:[%s235 + $0x4] sm:$0x2] %v628
      %v631 = vunpack.c.l.b16 %v626
      %v632 = vpack.c.b16 %v631, %v631
      %v633 = vrot.slane %v632, 1
      %v635 = vsel %vm295, %v633, 0
      %637 = vmatpush.bf16.msra.mxu0 0
      %638 = vmatpush.bf16.msra.mxu0 0
      %639 = vmatpush.bf16.msra.mxu0 0
      %640 = vmatpush.bf16.msra.mxu0 0
      %641 = vmatpush.bf16.msra.mxu0 0
      %642 = vmatpush.bf16.msra.mxu0 0
      %643 = vmatpush.bf16.msra.mxu0 %v292
      %644 = vmatpush.bf16.msra.mxu0 %v291
      %645 = vmatmul.bf16.gmra.mxu0 %v635
      %v646 = vpop.f32.mrf.mxu0
      %v647 = vadd.f32 0.0, %v646
      %v648 = vpop.f32.mrf.mxu0
      %649 = vdwg.mxu0
      %v651 = vrot.slane %v647, 5
      %v653 = vadd.f32 %v275, %v651
      %v654 = vtanh.pop %v653
      %v655 = vpack.c.bf16 %v654, %v654
      %v656 = vld [vmem:[%s235 + $0x4] sm:$0x2]
      %v657 = vsel %vm409, %v655, %v656
      %658 = vst [vmem:[%s235 + $0x4] sm:$0x2] %v657
      %v660 = vunpack.c.l.b16 %v655
      %v661 = vpack.c.b16 %v660, %v660
      %v663 = vshrl.u32 %v661, 16
      %v665 = vrot.slane %v663, 1
      %v667 = vsel %vm295, %v665, 0
      %669 = vmatpush.bf16.msra.mxu0 0
      %670 = vmatpush.bf16.msra.mxu0 0
      %671 = vmatpush.bf16.msra.mxu0 0
      %672 = vmatpush.bf16.msra.mxu0 0
      %673 = vmatpush.bf16.msra.mxu0 0
      %674 = vmatpush.bf16.msra.mxu0 0
      %675 = vmatpush.bf16.msra.mxu0 %v292
      %676 = vmatpush.bf16.msra.mxu0 %v291
      %677 = vmatmul.bf16.gmra.mxu0 %v667
      %v678 = vpop.f32.mrf.mxu0
      %v679 = vadd.f32 0.0, %v678
      %v680 = vpop.f32.mrf.mxu0
      %681 = vdwg.mxu0
      %v683 = vrot.slane %v679, 4
      %v685 = vadd.f32 %v275, %v683
      %v686 = vtanh.pop %v685
      %v687 = vpack.c.bf16 %v686, %v686
      %v688 = vld [vmem:[%s235 + $0x4] sm:$0x4]
      %v689 = vsel %vm444, %v687, %v688
      %690 = vst [vmem:[%s235 + $0x4] sm:$0x4] %v689
      %v692 = vunpack.c.l.b16 %v687
      %v693 = vpack.c.b16 %v692, %v692
      %v694 = vrot.slane %v693, 2
      %v696 = vsel %vm295, %v694, 0
      %698 = vmatpush.bf16.msra.mxu0 0
      %699 = vmatpush.bf16.msra.mxu0 0
      %700 = vmatpush.bf16.msra.mxu0 0
      %701 = vmatpush.bf16.msra.mxu0 0
      %702 = vmatpush.bf16.msra.mxu0 0
      %703 = vmatpush.bf16.msra.mxu0 0
      %704 = vmatpush.bf16.msra.mxu0 %v292
      %705 = vmatpush.bf16.msra.mxu0 %v291
      %706 = vmatmul.bf16.gmra.mxu0 %v696
      %v707 = vpop.f32.mrf.mxu0
      %v708 = vadd.f32 0.0, %v707
      %v709 = vpop.f32.mrf.mxu0
      %710 = vdwg.mxu0
      %v712 = vrot.slane %v708, 3
      %v714 = vadd.f32 %v275, %v712
      %v715 = vtanh.pop %v714
      %v716 = vpack.c.bf16 %v715, %v715
      %v717 = vld [vmem:[%s235 + $0x4] sm:$0x4]
      %v718 = vsel %vm475, %v716, %v717
      %719 = vst [vmem:[%s235 + $0x4] sm:$0x4] %v718
      %v721 = vunpack.c.l.b16 %v716
      %v722 = vpack.c.b16 %v721, %v721
      %v724 = vshrl.u32 %v722, 16
      %v726 = vrot.slane %v724, 2
      %v728 = vsel %vm295, %v726, 0
      %730 = vmatpush.bf16.msra.mxu0 0
      %731 = vmatpush.bf16.msra.mxu0 0
      %732 = vmatpush.bf16.msra.mxu0 0
      %733 = vmatpush.bf16.msra.mxu0 0
      %734 = vmatpush.bf16.msra.mxu0 0
      %735 = vmatpush.bf16.msra.mxu0 0
      %736 = vmatpush.bf16.msra.mxu0 %v292
      %737 = vmatpush.bf16.msra.mxu0 %v291
      %738 = vmatmul.bf16.gmra.mxu0 %v728
      %v739 = vpop.f32.mrf.mxu0
      %v740 = vadd.f32 0.0, %v739
      %v741 = vpop.f32.mrf.mxu0
      %742 = vdwg.mxu0
      %v744 = vrot.slane %v740, 2
      %v746 = vadd.f32 %v275, %v744
      %v747 = vtanh.pop %v746
      %v748 = vpack.c.bf16 %v747, %v747
      %v749 = vld [vmem:[%s235 + $0x4] sm:$0x8]
      %v750 = vsel %vm510, %v748, %v749
      %751 = vst [vmem:[%s235 + $0x4] sm:$0x8] %v750
      %v753 = vunpack.c.l.b16 %v748
      %v754 = vpack.c.b16 %v753, %v753
      %v755 = vrot.slane %v754, 3
      %v757 = vsel %vm295, %v755, 0
      %759 = vmatpush.bf16.msra.mxu0 0
      %760 = vmatpush.bf16.msra.mxu0 0
      %761 = vmatpush.bf16.msra.mxu0 0
      %762 = vmatpush.bf16.msra.mxu0 0
      %763 = vmatpush.bf16.msra.mxu0 0
      %764 = vmatpush.bf16.msra.mxu0 0
      %765 = vmatpush.bf16.msra.mxu0 %v292
      %766 = vmatpush.bf16.msra.mxu0 %v291
      %767 = vmatmul.bf16.gmra.mxu0 %v757
      %v768 = vpop.f32.mrf.mxu0
      %v769 = vadd.f32 0.0, %v768
      %v770 = vpop.f32.mrf.mxu0
      %771 = vdwg.mxu0
      %v773 = vrot.slane %v769, 1
      %v775 = vadd.f32 %v275, %v773
      %v776 = vtanh.pop %v775
      %v777 = vpack.c.bf16 %v776, %v776
      %v778 = vld [vmem:[%s235 + $0x4] sm:$0x8]
      %v779 = vsel %vm541, %v777, %v778
      %780 = vst [vmem:[%s235 + $0x4] sm:$0x8] %v779
      %vm781 = vcmask 261127
      %782 = vst.msk [vmem:[#allocation2 - $0x7] sm:$0x80] %vm781, %v776
      %s783 = smul.u32 2, %s20
      %p784 = scmp.lt.s32.totalorder %s19, 1
      %s785 = scalar_select %p784, %s19, 1
      %p786 = scmp.lt.s32.totalorder %s783, 5
      %s787 = scalar_select %p786, %s783, 5
      %s788 = smul.addr %s785, 6
      %s789 = sadd.s32 %s787, %s788
      %s790 = smul.addr %s789, 4
      %s791 = scalar_lea.vmem %s4, %s790
      // Predicated region
      $region41: #{tpu_custom_call.1} parent=35 // pred_check
        %p792 = pneg %p138
      $region42: #{tpu_custom_call.1} parent=35 // pred_check_branch
        %794 = sbr.rel (%p792) target = $region44
      $region43: #{tpu_custom_call.1} parent=35 // pred_region
        %s795 = smul.u32 2, %s20
      $region44: #{tpu_custom_call.1} parent=35 // pred_fallthru
        _
    $region36: #{tpu_custom_call.1} parent=5 // pred_fallthru
      _
    %p796 = scmp.le.s32.totalorder 2, %s10
    // Predicated region
    $region45: #{tpu_custom_call.1} parent=5 // pred_check
      %p797 = pneg %p796
    $region46: #{tpu_custom_call.1} parent=5 // pred_check_branch
      %799 = sbr.rel (%p797) target = $region48
    $region47: #{tpu_custom_call.1} parent=5 // pred_region
      %s800 = ssub.s32 %s10, 2
      // Predicated region
      $region49: #{tpu_custom_call.1} parent=47 // pred_check
        %p801 = pneg %p144
      $region50: #{tpu_custom_call.1} parent=47 // pred_check_branch
        %803 = sbr.rel (%p801) target = $region52
      $region51: #{tpu_custom_call.1} parent=47 // pred_region
        %s804 = smul.u32 2, %s22
        %p805 = scmp.lt.s32.totalorder %s21, 1
        %s806 = scalar_select %p805, %s21, 1
        %p807 = scmp.lt.s32.totalorder %s804, 5
        %s808 = scalar_select %p807, %s804, 5
        %s809 = smul.addr %s806, 6
        %s810 = sadd.s32 %s808, %s809
        %s811 = smul.addr %s810, 4
        %s812 = scalar_lea.vmem %s4, %s811
      $region52: #{tpu_custom_call.1} parent=47 // pred_fallthru
        _
    $region48: #{tpu_custom_call.1} parent=5 // pred_fallthru
      _
  $region6: #{tpu_custom_call.1} parent=0 // loop_footer
    %s14 = sadd.s32 1, %s10
  $region7: #{tpu_custom_call.1} parent=0 // loop_footer_branch
    %9 = sbr.rel target = $region3
  $region8: #{tpu_custom_call.1} parent=0 // loop_exit
    _

</llo_original>
